<compile_context>
chip_gen: v5e
topology: v5e:2x2
jax: 0.10.0
libtpu: 0.0.40
codegen_flags: <defaults>
</compile_context>

<pallas_src>
import jax
import jax.numpy as jnp
from jax.experimental import pallas as pl
from jax.experimental.pallas import tpu as pltpu


# ---------------------------------------------------------------------------
# Pallas kernel: stacked tanh-RNN recurrence -> last hidden -> linear -> softmax
# ---------------------------------------------------------------------------
def make_rnn_kernel(T, H, num_layers):
    def kernel(x_ref,        # (T, Bt, C_in)   time-major input block
               wih0_ref,     # (C_in, H)       layer-0 input->hidden
               wihr_ref,     # (max(L-1,1), H, H)  layers 1.. input(=prev hidden)->hidden
               whh_ref,      # (L, H, H)       hidden->hidden, every layer
               b_ref,        # (L, 1, H)       b_ih + b_hh, every layer
               wro_ref,      # (H, O)          readout linear
               bro_ref,      # (1, O)
               out_ref):     # (Bt, O)
        # ---- hoist all weights out of the recurrence (one VMEM->vreg load each) ----
        wih0 = wih0_ref[...]
        wihr = wihr_ref[...] if num_layers > 1 else None
        whh = whh_ref[...]
        b = b_ref[...]
        wro = wro_ref[...]
        bro = bro_ref[...]

        Bt = out_ref.shape[0]
        hs0 = tuple(jnp.zeros((Bt, H), jnp.float32) for _ in range(num_layers))

        def step(t, hs):
            inp = x_ref[t]                                     # (Bt, C_in) leading-axis index
            new_hs = []
            for l in range(num_layers):                        # static, small layer loop
                wih_l = wih0 if l == 0 else wihr[l - 1]
                h = jnp.tanh(
                    jnp.dot(inp, wih_l, preferred_element_type=jnp.float32)
                    + jnp.dot(hs[l], whh[l], preferred_element_type=jnp.float32)
                    + b[l])
                new_hs.append(h)
                inp = h
            return tuple(new_hs)

        hs = jax.lax.fori_loop(0, T, step, hs0, unroll=True)   # T is small & static here

        # readout + numerically-stable softmax on the last top-layer hidden state
        logits = jnp.dot(hs[num_layers - 1], wro,
                         preferred_element_type=jnp.float32) + bro          # (Bt, O)
        logits = logits - jnp.max(logits, axis=-1, keepdims=True)
        e = jnp.exp(logits)
        out_ref[...] = e / jnp.sum(e, axis=-1, keepdims=True)

    return kernel


# ---------------------------------------------------------------------------
# Wrapper: layout plumbing + pallas_call (batch grid, resident weights)
# ---------------------------------------------------------------------------
def rnn_forward(x, params, num_layers, times=None, interpolation_method=None):
    # `times` / `interpolation_method` are unused by the PyTorch module's forward.
    del times, interpolation_method
    B, T, C_in = x.shape
    H = params["whh"].shape[-1]
    O = params["wro"].shape[1]
    L = num_layers

    x_tm = jnp.transpose(x, (1, 0, 2))            # time-major (T, B, C_in)

    Bt = B if B <= 128 else 128                   # batch tile (full array or 128 rows)
    grid = (pl.cdiv(B, Bt),)

    kernel = make_rnn_kernel(T, H, L)

    return pl.pallas_call(
        kernel,
        out_shape=jax.ShapeDtypeStruct((B, O), jnp.float32),
        grid=grid,
        in_specs=[
            pl.BlockSpec((T, Bt, C_in), lambda i: (0, i, 0)),        # streamed per batch block
            pl.BlockSpec(params["wih0"].shape, lambda i: (0, 0)),    # weights: block 0 always
            pl.BlockSpec(params["wih_rest"].shape, lambda i: (0, 0, 0)),
            pl.BlockSpec(params["whh"].shape, lambda i: (0, 0, 0)),
            pl.BlockSpec(params["b"].shape, lambda i: (0, 0, 0)),
            pl.BlockSpec(params["wro"].shape, lambda i: (0, 0)),
            pl.BlockSpec(params["bro"].shape, lambda i: (0, 0)),
        ],
        out_specs=pl.BlockSpec((Bt, O), lambda i: (i, 0)),
        compiler_params=pltpu.CompilerParams(
            dimension_semantics=("parallel",)),                      # shard batch over cores
    )(x_tm, params["wih0"], params["wih_rest"], params["whh"],
      params["b"], params["wro"], params["bro"])


# ---------------------------------------------------------------------------
# Pure-JAX reference (mirrors torch.nn.RNN(batch_first=True) + Linear + softmax)
# ---------------------------------------------------------------------------
def rnn_reference(x, params, num_layers):
    B, T, C_in = x.shape
    H = params["whh"].shape[-1]
    hs = [jnp.zeros((B, H), jnp.float32) for _ in range(num_layers)]
    for t in range(T):
        inp = x[:, t, :]
        for l in range(num_layers):
            wih = params["wih0"] if l == 0 else params["wih_rest"][l - 1]
            h = jnp.tanh(inp @ wih + hs[l] @ params["whh"][l] + params["b"][l])
            hs[l] = h
            inp = h
    logits = hs[-1] @ params["wro"] + params["bro"]
    return jax.nn.softmax(logits, axis=-1)


# ---------------------------------------------------------------------------
# Deterministic parameter init (torch.nn.RNN / nn.Linear style uniform init),
# pre-transposed to right-multiply form and with b_ih + b_hh folded together.
# ---------------------------------------------------------------------------
def init_params(key, C_in, H, L, O):
    def uniform(k, shape, bound):
        return jax.random.uniform(k, shape, jnp.float32, -bound, bound)

    keys = jax.random.split(key, 4 * L + 2)
    bound_rnn = 1.0 / jnp.sqrt(H)

    wih0 = uniform(keys[0], (C_in, H), bound_rnn)
    wih_rest = jnp.stack(
        [uniform(keys[1 + l], (H, H), bound_rnn) for l in range(max(L - 1, 1))], axis=0)
    whh = jnp.stack(
        [uniform(keys[L + l], (H, H), bound_rnn) for l in range(L)], axis=0)
    b = jnp.stack(
        [(uniform(keys[2 * L + l], (H,), bound_rnn)
          + uniform(keys[3 * L + l], (H,), bound_rnn))[None, :] for l in range(L)], axis=0)

    bound_lin = 1.0 / jnp.sqrt(H)
    wro = uniform(keys[4 * L], (H, O), bound_lin)
    bro = uniform(keys[4 * L + 1], (O,), bound_lin)[None, :]

    return {"wih0": wih0, "wih_rest": wih_rest, "whh": whh, "b": b,
            "wro": wro, "bro": bro}


if __name__ == "__main__":
    key = jax.random.PRNGKey(0)
    B, T, C_in, H, L, O = 8, 8, 4, 32, 2, 10   # batch, seq, input, hidden, layers, output

    k_data, k_param = jax.random.split(key)
    x = jax.random.normal(k_data, (B, T, C_in), jnp.float32)
    times = jnp.arange(T, dtype=jnp.float32)   # accepted-but-unused, as in the PyTorch forward
    params = init_params(k_param, C_in, H, L, O)

    out = rnn_forward(x, params, L, times, "linear")
    out = jax.block_until_ready(out)

    ref = rnn_reference(x, params, L)
    assert out.shape == (B, O)
    assert jnp.allclose(out, ref, atol=2e-5, rtol=2e-5), "Pallas kernel mismatch vs JAX reference"
    assert jnp.allclose(jnp.sum(out, axis=-1), 1.0, atol=1e-5), "softmax rows must sum to 1"

    print("KERNEL_OK")
</pallas_src>

<mosaic_0001>
module attributes {stable_mosaic.version = 11 : i64} {
  func.func @kernel(%arg0: i32, %arg1: memref<8x8x4xf32, #tpu.memory_space<vmem>>, %arg2: memref<4x32xf32, #tpu.memory_space<vmem>>, %arg3: memref<1x32x32xf32, #tpu.memory_space<vmem>>, %arg4: memref<2x32x32xf32, #tpu.memory_space<vmem>>, %arg5: memref<2x1x32xf32, #tpu.memory_space<vmem>>, %arg6: memref<32x10xf32, #tpu.memory_space<vmem>>, %arg7: memref<1x10xf32, #tpu.memory_space<vmem>>, %arg8: memref<8x10xf32, #tpu.memory_space<vmem>>) attributes {dimension_semantics = [#tpu.dimension_semantics<parallel>], iteration_bounds = array<i64: 1>, scalar_prefetch = 0 : i64, scratch_operands = 0 : i64, tpu.core_type = #tpu.core_type<tc>, window_params = [{transform_indices = @transform_0, window_bounds = array<i64: 8, 8, 4>}, {pipeline_mode = #tpu.pipeline_mode<synchronous>, transform_indices = @transform_1, window_bounds = array<i64: 4, 32>}, {pipeline_mode = #tpu.pipeline_mode<synchronous>, transform_indices = @transform_2, window_bounds = array<i64: 1, 32, 32>}, {pipeline_mode = #tpu.pipeline_mode<synchronous>, transform_indices = @transform_3, window_bounds = array<i64: 2, 32, 32>}, {pipeline_mode = #tpu.pipeline_mode<synchronous>, transform_indices = @transform_4, window_bounds = array<i64: 2, 1, 32>}, {pipeline_mode = #tpu.pipeline_mode<synchronous>, transform_indices = @transform_5, window_bounds = array<i64: 32, 10>}, {pipeline_mode = #tpu.pipeline_mode<synchronous>, transform_indices = @transform_6, window_bounds = array<i64: 1, 10>}, {transform_indices = @transform_7, window_bounds = array<i64: 8, 10>}]} {
    %c0 = arith.constant 0 : index
    %c0_0 = arith.constant 0 : index
    %0 = vector.load %arg2[%c0, %c0_0] : memref<4x32xf32, #tpu.memory_space<vmem>>, vector<4x32xf32>
    %c0_1 = arith.constant 0 : index
    %c0_2 = arith.constant 0 : index
    %c0_3 = arith.constant 0 : index
    %1 = vector.load %arg3[%c0_1, %c0_2, %c0_3] : memref<1x32x32xf32, #tpu.memory_space<vmem>>, vector<1x32x32xf32>
    %c0_4 = arith.constant 0 : index
    %c0_5 = arith.constant 0 : index
    %c0_6 = arith.constant 0 : index
    %2 = vector.load %arg4[%c0_4, %c0_5, %c0_6] : memref<2x32x32xf32, #tpu.memory_space<vmem>>, vector<2x32x32xf32>
    %c0_7 = arith.constant 0 : index
    %c0_8 = arith.constant 0 : index
    %c0_9 = arith.constant 0 : index
    %3 = vector.load %arg5[%c0_7, %c0_8, %c0_9] : memref<2x1x32xf32, #tpu.memory_space<vmem>>, vector<2x1x32xf32>
    %c0_10 = arith.constant 0 : index
    %c0_11 = arith.constant 0 : index
    %4 = vector.load %arg6[%c0_10, %c0_11] : memref<32x10xf32, #tpu.memory_space<vmem>>, vector<32x10xf32>
    %c0_12 = arith.constant 0 : index
    %c0_13 = arith.constant 0 : index
    %5 = vector.load %arg7[%c0_12, %c0_13] : memref<1x10xf32, #tpu.memory_space<vmem>>, vector<1x10xf32>
    %cst = arith.constant 0.000000e+00 : f32
    %6 = vector.broadcast %cst : f32 to vector<8x32xf32>
    %cst_14 = arith.constant 0.000000e+00 : f32
    %7 = vector.broadcast %cst_14 : f32 to vector<8x32xf32>
    %c0_i32 = arith.constant 0 : i32
    %8 = arith.index_cast %c0_i32 : i32 to index
    %c0_15 = arith.constant 0 : index
    %c0_16 = arith.constant 0 : index
    %9 = vector.load %arg1[%8, %c0_15, %c0_16] : memref<8x8x4xf32, #tpu.memory_space<vmem>>, vector<1x8x4xf32>
    %10 = vector.shape_cast %9 : vector<1x8x4xf32> to vector<8x4xf32>
    %cst_17 = arith.constant dense<0.000000e+00> : vector<8x32xf32>
    %11 = tpu.matmul %10, %0, %cst_17 {dimension_numbers = #tpu.dot_dimension_numbers<[1], [0], [0], [1], [0, 0, 1, 1], [], []>} : vector<8x4xf32>, vector<4x32xf32>, vector<8x32xf32> -> vector<8x32xf32>
    %12 = vector.extract_strided_slice %2 {offsets = [0, 0, 0], sizes = [1, 32, 32], strides = [1, 1, 1]} : vector<2x32x32xf32> to vector<1x32x32xf32>
    %13 = vector.shape_cast %12 : vector<1x32x32xf32> to vector<32x32xf32>
    %cst_18 = arith.constant dense<0.000000e+00> : vector<8x32xf32>
    %14 = tpu.matmul %6, %13, %cst_18 {dimension_numbers = #tpu.dot_dimension_numbers<[1], [0], [0], [1], [0, 0, 1, 1], [], []>} : vector<8x32xf32>, vector<32x32xf32>, vector<8x32xf32> -> vector<8x32xf32>
    %15 = arith.addf %11, %14 : vector<8x32xf32>
    %16 = vector.extract_strided_slice %3 {offsets = [0, 0, 0], sizes = [1, 1, 32], strides = [1, 1, 1]} : vector<2x1x32xf32> to vector<1x1x32xf32>
    %17 = vector.shape_cast %16 : vector<1x1x32xf32> to vector<1x32xf32>
    %18 = vector.broadcast %17 : vector<1x32xf32> to vector<8x32xf32>
    %19 = arith.addf %15, %18 : vector<8x32xf32>
    %20 = math.tanh %19 : vector<8x32xf32>
    %21 = vector.shape_cast %1 : vector<1x32x32xf32> to vector<32x32xf32>
    %cst_19 = arith.constant dense<0.000000e+00> : vector<8x32xf32>
    %22 = tpu.matmul %20, %21, %cst_19 {dimension_numbers = #tpu.dot_dimension_numbers<[1], [0], [0], [1], [0, 0, 1, 1], [], []>} : vector<8x32xf32>, vector<32x32xf32>, vector<8x32xf32> -> vector<8x32xf32>
    %23 = vector.extract_strided_slice %2 {offsets = [1, 0, 0], sizes = [1, 32, 32], strides = [1, 1, 1]} : vector<2x32x32xf32> to vector<1x32x32xf32>
    %24 = vector.shape_cast %23 : vector<1x32x32xf32> to vector<32x32xf32>
    %cst_20 = arith.constant dense<0.000000e+00> : vector<8x32xf32>
    %25 = tpu.matmul %7, %24, %cst_20 {dimension_numbers = #tpu.dot_dimension_numbers<[1], [0], [0], [1], [0, 0, 1, 1], [], []>} : vector<8x32xf32>, vector<32x32xf32>, vector<8x32xf32> -> vector<8x32xf32>
    %26 = arith.addf %22, %25 : vector<8x32xf32>
    %27 = vector.extract_strided_slice %3 {offsets = [1, 0, 0], sizes = [1, 1, 32], strides = [1, 1, 1]} : vector<2x1x32xf32> to vector<1x1x32xf32>
    %28 = vector.shape_cast %27 : vector<1x1x32xf32> to vector<1x32xf32>
    %29 = vector.broadcast %28 : vector<1x32xf32> to vector<8x32xf32>
    %30 = arith.addf %26, %29 : vector<8x32xf32>
    %31 = math.tanh %30 : vector<8x32xf32>
    %c1_i32 = arith.constant 1 : i32
    %32 = arith.index_cast %c1_i32 : i32 to index
    %c0_21 = arith.constant 0 : index
    %c0_22 = arith.constant 0 : index
    %33 = vector.load %arg1[%32, %c0_21, %c0_22] : memref<8x8x4xf32, #tpu.memory_space<vmem>>, vector<1x8x4xf32>
    %34 = vector.shape_cast %33 : vector<1x8x4xf32> to vector<8x4xf32>
    %cst_23 = arith.constant dense<0.000000e+00> : vector<8x32xf32>
    %35 = tpu.matmul %34, %0, %cst_23 {dimension_numbers = #tpu.dot_dimension_numbers<[1], [0], [0], [1], [0, 0, 1, 1], [], []>} : vector<8x4xf32>, vector<4x32xf32>, vector<8x32xf32> -> vector<8x32xf32>
    %36 = vector.extract_strided_slice %2 {offsets = [0, 0, 0], sizes = [1, 32, 32], strides = [1, 1, 1]} : vector<2x32x32xf32> to vector<1x32x32xf32>
    %37 = vector.shape_cast %36 : vector<1x32x32xf32> to vector<32x32xf32>
    %cst_24 = arith.constant dense<0.000000e+00> : vector<8x32xf32>
    %38 = tpu.matmul %20, %37, %cst_24 {dimension_numbers = #tpu.dot_dimension_numbers<[1], [0], [0], [1], [0, 0, 1, 1], [], []>} : vector<8x32xf32>, vector<32x32xf32>, vector<8x32xf32> -> vector<8x32xf32>
    %39 = arith.addf %35, %38 : vector<8x32xf32>
    %40 = vector.extract_strided_slice %3 {offsets = [0, 0, 0], sizes = [1, 1, 32], strides = [1, 1, 1]} : vector<2x1x32xf32> to vector<1x1x32xf32>
    %41 = vector.shape_cast %40 : vector<1x1x32xf32> to vector<1x32xf32>
    %42 = vector.broadcast %41 : vector<1x32xf32> to vector<8x32xf32>
    %43 = arith.addf %39, %42 : vector<8x32xf32>
    %44 = math.tanh %43 : vector<8x32xf32>
    %45 = vector.shape_cast %1 : vector<1x32x32xf32> to vector<32x32xf32>
    %cst_25 = arith.constant dense<0.000000e+00> : vector<8x32xf32>
    %46 = tpu.matmul %44, %45, %cst_25 {dimension_numbers = #tpu.dot_dimension_numbers<[1], [0], [0], [1], [0, 0, 1, 1], [], []>} : vector<8x32xf32>, vector<32x32xf32>, vector<8x32xf32> -> vector<8x32xf32>
    %47 = vector.extract_strided_slice %2 {offsets = [1, 0, 0], sizes = [1, 32, 32], strides = [1, 1, 1]} : vector<2x32x32xf32> to vector<1x32x32xf32>
    %48 = vector.shape_cast %47 : vector<1x32x32xf32> to vector<32x32xf32>
    %cst_26 = arith.constant dense<0.000000e+00> : vector<8x32xf32>
    %49 = tpu.matmul %31, %48, %cst_26 {dimension_numbers = #tpu.dot_dimension_numbers<[1], [0], [0], [1], [0, 0, 1, 1], [], []>} : vector<8x32xf32>, vector<32x32xf32>, vector<8x32xf32> -> vector<8x32xf32>
    %50 = arith.addf %46, %49 : vector<8x32xf32>
    %51 = vector.extract_strided_slice %3 {offsets = [1, 0, 0], sizes = [1, 1, 32], strides = [1, 1, 1]} : vector<2x1x32xf32> to vector<1x1x32xf32>
    %52 = vector.shape_cast %51 : vector<1x1x32xf32> to vector<1x32xf32>
    %53 = vector.broadcast %52 : vector<1x32xf32> to vector<8x32xf32>
    %54 = arith.addf %50, %53 : vector<8x32xf32>
    %55 = math.tanh %54 : vector<8x32xf32>
    %c2_i32 = arith.constant 2 : i32
    %56 = arith.index_cast %c2_i32 : i32 to index
    %c0_27 = arith.constant 0 : index
    %c0_28 = arith.constant 0 : index
    %57 = vector.load %arg1[%56, %c0_27, %c0_28] : memref<8x8x4xf32, #tpu.memory_space<vmem>>, vector<1x8x4xf32>
    %58 = vector.shape_cast %57 : vector<1x8x4xf32> to vector<8x4xf32>
    %cst_29 = arith.constant dense<0.000000e+00> : vector<8x32xf32>
    %59 = tpu.matmul %58, %0, %cst_29 {dimension_numbers = #tpu.dot_dimension_numbers<[1], [0], [0], [1], [0, 0, 1, 1], [], []>} : vector<8x4xf32>, vector<4x32xf32>, vector<8x32xf32> -> vector<8x32xf32>
    %60 = vector.extract_strided_slice %2 {offsets = [0, 0, 0], sizes = [1, 32, 32], strides = [1, 1, 1]} : vector<2x32x32xf32> to vector<1x32x32xf32>
    %61 = vector.shape_cast %60 : vector<1x32x32xf32> to vector<32x32xf32>
    %cst_30 = arith.constant dense<0.000000e+00> : vector<8x32xf32>
    %62 = tpu.matmul %44, %61, %cst_30 {dimension_numbers = #tpu.dot_dimension_numbers<[1], [0], [0], [1], [0, 0, 1, 1], [], []>} : vector<8x32xf32>, vector<32x32xf32>, vector<8x32xf32> -> vector<8x32xf32>
    %63 = arith.addf %59, %62 : vector<8x32xf32>
    %64 = vector.extract_strided_slice %3 {offsets = [0, 0, 0], sizes = [1, 1, 32], strides = [1, 1, 1]} : vector<2x1x32xf32> to vector<1x1x32xf32>
    %65 = vector.shape_cast %64 : vector<1x1x32xf32> to vector<1x32xf32>
    %66 = vector.broadcast %65 : vector<1x32xf32> to vector<8x32xf32>
    %67 = arith.addf %63, %66 : vector<8x32xf32>
    %68 = math.tanh %67 : vector<8x32xf32>
    %69 = vector.shape_cast %1 : vector<1x32x32xf32> to vector<32x32xf32>
    %cst_31 = arith.constant dense<0.000000e+00> : vector<8x32xf32>
    %70 = tpu.matmul %68, %69, %cst_31 {dimension_numbers = #tpu.dot_dimension_numbers<[1], [0], [0], [1], [0, 0, 1, 1], [], []>} : vector<8x32xf32>, vector<32x32xf32>, vector<8x32xf32> -> vector<8x32xf32>
    %71 = vector.extract_strided_slice %2 {offsets = [1, 0, 0], sizes = [1, 32, 32], strides = [1, 1, 1]} : vector<2x32x32xf32> to vector<1x32x32xf32>
    %72 = vector.shape_cast %71 : vector<1x32x32xf32> to vector<32x32xf32>
    %cst_32 = arith.constant dense<0.000000e+00> : vector<8x32xf32>
    %73 = tpu.matmul %55, %72, %cst_32 {dimension_numbers = #tpu.dot_dimension_numbers<[1], [0], [0], [1], [0, 0, 1, 1], [], []>} : vector<8x32xf32>, vector<32x32xf32>, vector<8x32xf32> -> vector<8x32xf32>
    %74 = arith.addf %70, %73 : vector<8x32xf32>
    %75 = vector.extract_strided_slice %3 {offsets = [1, 0, 0], sizes = [1, 1, 32], strides = [1, 1, 1]} : vector<2x1x32xf32> to vector<1x1x32xf32>
    %76 = vector.shape_cast %75 : vector<1x1x32xf32> to vector<1x32xf32>
    %77 = vector.broadcast %76 : vector<1x32xf32> to vector<8x32xf32>
    %78 = arith.addf %74, %77 : vector<8x32xf32>
    %79 = math.tanh %78 : vector<8x32xf32>
    %c3_i32 = arith.constant 3 : i32
    %80 = arith.index_cast %c3_i32 : i32 to index
    %c0_33 = arith.constant 0 : index
    %c0_34 = arith.constant 0 : index
    %81 = vector.load %arg1[%80, %c0_33, %c0_34] : memref<8x8x4xf32, #tpu.memory_space<vmem>>, vector<1x8x4xf32>
    %82 = vector.shape_cast %81 : vector<1x8x4xf32> to vector<8x4xf32>
    %cst_35 = arith.constant dense<0.000000e+00> : vector<8x32xf32>
    %83 = tpu.matmul %82, %0, %cst_35 {dimension_numbers = #tpu.dot_dimension_numbers<[1], [0], [0], [1], [0, 0, 1, 1], [], []>} : vector<8x4xf32>, vector<4x32xf32>, vector<8x32xf32> -> vector<8x32xf32>
    %84 = vector.extract_strided_slice %2 {offsets = [0, 0, 0], sizes = [1, 32, 32], strides = [1, 1, 1]} : vector<2x32x32xf32> to vector<1x32x32xf32>
    %85 = vector.shape_cast %84 : vector<1x32x32xf32> to vector<32x32xf32>
    %cst_36 = arith.constant dense<0.000000e+00> : vector<8x32xf32>
    %86 = tpu.matmul %68, %85, %cst_36 {dimension_numbers = #tpu.dot_dimension_numbers<[1], [0], [0], [1], [0, 0, 1, 1], [], []>} : vector<8x32xf32>, vector<32x32xf32>, vector<8x32xf32> -> vector<8x32xf32>
    %87 = arith.addf %83, %86 : vector<8x32xf32>
    %88 = vector.extract_strided_slice %3 {offsets = [0, 0, 0], sizes = [1, 1, 32], strides = [1, 1, 1]} : vector<2x1x32xf32> to vector<1x1x32xf32>
    %89 = vector.shape_cast %88 : vector<1x1x32xf32> to vector<1x32xf32>
    %90 = vector.broadcast %89 : vector<1x32xf32> to vector<8x32xf32>
    %91 = arith.addf %87, %90 : vector<8x32xf32>
    %92 = math.tanh %91 : vector<8x32xf32>
    %93 = vector.shape_cast %1 : vector<1x32x32xf32> to vector<32x32xf32>
    %cst_37 = arith.constant dense<0.000000e+00> : vector<8x32xf32>
    %94 = tpu.matmul %92, %93, %cst_37 {dimension_numbers = #tpu.dot_dimension_numbers<[1], [0], [0], [1], [0, 0, 1, 1], [], []>} : vector<8x32xf32>, vector<32x32xf32>, vector<8x32xf32> -> vector<8x32xf32>
    %95 = vector.extract_strided_slice %2 {offsets = [1, 0, 0], sizes = [1, 32, 32], strides = [1, 1, 1]} : vector<2x32x32xf32> to vector<1x32x32xf32>
    %96 = vector.shape_cast %95 : vector<1x32x32xf32> to vector<32x32xf32>
    %cst_38 = arith.constant dense<0.000000e+00> : vector<8x32xf32>
    %97 = tpu.matmul %79, %96, %cst_38 {dimension_numbers = #tpu.dot_dimension_numbers<[1], [0], [0], [1], [0, 0, 1, 1], [], []>} : vector<8x32xf32>, vector<32x32xf32>, vector<8x32xf32> -> vector<8x32xf32>
    %98 = arith.addf %94, %97 : vector<8x32xf32>
    %99 = vector.extract_strided_slice %3 {offsets = [1, 0, 0], sizes = [1, 1, 32], strides = [1, 1, 1]} : vector<2x1x32xf32> to vector<1x1x32xf32>
    %100 = vector.shape_cast %99 : vector<1x1x32xf32> to vector<1x32xf32>
    %101 = vector.broadcast %100 : vector<1x32xf32> to vector<8x32xf32>
    %102 = arith.addf %98, %101 : vector<8x32xf32>
    %103 = math.tanh %102 : vector<8x32xf32>
    %c4_i32 = arith.constant 4 : i32
    %104 = arith.index_cast %c4_i32 : i32 to index
    %c0_39 = arith.constant 0 : index
    %c0_40 = arith.constant 0 : index
    %105 = vector.load %arg1[%104, %c0_39, %c0_40] : memref<8x8x4xf32, #tpu.memory_space<vmem>>, vector<1x8x4xf32>
    %106 = vector.shape_cast %105 : vector<1x8x4xf32> to vector<8x4xf32>
    %cst_41 = arith.constant dense<0.000000e+00> : vector<8x32xf32>
    %107 = tpu.matmul %106, %0, %cst_41 {dimension_numbers = #tpu.dot_dimension_numbers<[1], [0], [0], [1], [0, 0, 1, 1], [], []>} : vector<8x4xf32>, vector<4x32xf32>, vector<8x32xf32> -> vector<8x32xf32>
    %108 = vector.extract_strided_slice %2 {offsets = [0, 0, 0], sizes = [1, 32, 32], strides = [1, 1, 1]} : vector<2x32x32xf32> to vector<1x32x32xf32>
    %109 = vector.shape_cast %108 : vector<1x32x32xf32> to vector<32x32xf32>
    %cst_42 = arith.constant dense<0.000000e+00> : vector<8x32xf32>
    %110 = tpu.matmul %92, %109, %cst_42 {dimension_numbers = #tpu.dot_dimension_numbers<[1], [0], [0], [1], [0, 0, 1, 1], [], []>} : vector<8x32xf32>, vector<32x32xf32>, vector<8x32xf32> -> vector<8x32xf32>
    %111 = arith.addf %107, %110 : vector<8x32xf32>
    %112 = vector.extract_strided_slice %3 {offsets = [0, 0, 0], sizes = [1, 1, 32], strides = [1, 1, 1]} : vector<2x1x32xf32> to vector<1x1x32xf32>
    %113 = vector.shape_cast %112 : vector<1x1x32xf32> to vector<1x32xf32>
    %114 = vector.broadcast %113 : vector<1x32xf32> to vector<8x32xf32>
    %115 = arith.addf %111, %114 : vector<8x32xf32>
    %116 = math.tanh %115 : vector<8x32xf32>
    %117 = vector.shape_cast %1 : vector<1x32x32xf32> to vector<32x32xf32>
    %cst_43 = arith.constant dense<0.000000e+00> : vector<8x32xf32>
    %118 = tpu.matmul %116, %117, %cst_43 {dimension_numbers = #tpu.dot_dimension_numbers<[1], [0], [0], [1], [0, 0, 1, 1], [], []>} : vector<8x32xf32>, vector<32x32xf32>, vector<8x32xf32> -> vector<8x32xf32>
    %119 = vector.extract_strided_slice %2 {offsets = [1, 0, 0], sizes = [1, 32, 32], strides = [1, 1, 1]} : vector<2x32x32xf32> to vector<1x32x32xf32>
    %120 = vector.shape_cast %119 : vector<1x32x32xf32> to vector<32x32xf32>
    %cst_44 = arith.constant dense<0.000000e+00> : vector<8x32xf32>
    %121 = tpu.matmul %103, %120, %cst_44 {dimension_numbers = #tpu.dot_dimension_numbers<[1], [0], [0], [1], [0, 0, 1, 1], [], []>} : vector<8x32xf32>, vector<32x32xf32>, vector<8x32xf32> -> vector<8x32xf32>
    %122 = arith.addf %118, %121 : vector<8x32xf32>
    %123 = vector.extract_strided_slice %3 {offsets = [1, 0, 0], sizes = [1, 1, 32], strides = [1, 1, 1]} : vector<2x1x32xf32> to vector<1x1x32xf32>
    %124 = vector.shape_cast %123 : vector<1x1x32xf32> to vector<1x32xf32>
    %125 = vector.broadcast %124 : vector<1x32xf32> to vector<8x32xf32>
    %126 = arith.addf %122, %125 : vector<8x32xf32>
    %127 = math.tanh %126 : vector<8x32xf32>
    %c5_i32 = arith.constant 5 : i32
    %128 = arith.index_cast %c5_i32 : i32 to index
    %c0_45 = arith.constant 0 : index
    %c0_46 = arith.constant 0 : index
    %129 = vector.load %arg1[%128, %c0_45, %c0_46] : memref<8x8x4xf32, #tpu.memory_space<vmem>>, vector<1x8x4xf32>
    %130 = vector.shape_cast %129 : vector<1x8x4xf32> to vector<8x4xf32>
    %cst_47 = arith.constant dense<0.000000e+00> : vector<8x32xf32>
    %131 = tpu.matmul %130, %0, %cst_47 {dimension_numbers = #tpu.dot_dimension_numbers<[1], [0], [0], [1], [0, 0, 1, 1], [], []>} : vector<8x4xf32>, vector<4x32xf32>, vector<8x32xf32> -> vector<8x32xf32>
    %132 = vector.extract_strided_slice %2 {offsets = [0, 0, 0], sizes = [1, 32, 32], strides = [1, 1, 1]} : vector<2x32x32xf32> to vector<1x32x32xf32>
    %133 = vector.shape_cast %132 : vector<1x32x32xf32> to vector<32x32xf32>
    %cst_48 = arith.constant dense<0.000000e+00> : vector<8x32xf32>
    %134 = tpu.matmul %116, %133, %cst_48 {dimension_numbers = #tpu.dot_dimension_numbers<[1], [0], [0], [1], [0, 0, 1, 1], [], []>} : vector<8x32xf32>, vector<32x32xf32>, vector<8x32xf32> -> vector<8x32xf32>
    %135 = arith.addf %131, %134 : vector<8x32xf32>
    %136 = vector.extract_strided_slice %3 {offsets = [0, 0, 0], sizes = [1, 1, 32], strides = [1, 1, 1]} : vector<2x1x32xf32> to vector<1x1x32xf32>
    %137 = vector.shape_cast %136 : vector<1x1x32xf32> to vector<1x32xf32>
    %138 = vector.broadcast %137 : vector<1x32xf32> to vector<8x32xf32>
    %139 = arith.addf %135, %138 : vector<8x32xf32>
    %140 = math.tanh %139 : vector<8x32xf32>
    %141 = vector.shape_cast %1 : vector<1x32x32xf32> to vector<32x32xf32>
    %cst_49 = arith.constant dense<0.000000e+00> : vector<8x32xf32>
    %142 = tpu.matmul %140, %141, %cst_49 {dimension_numbers = #tpu.dot_dimension_numbers<[1], [0], [0], [1], [0, 0, 1, 1], [], []>} : vector<8x32xf32>, vector<32x32xf32>, vector<8x32xf32> -> vector<8x32xf32>
    %143 = vector.extract_strided_slice %2 {offsets = [1, 0, 0], sizes = [1, 32, 32], strides = [1, 1, 1]} : vector<2x32x32xf32> to vector<1x32x32xf32>
    %144 = vector.shape_cast %143 : vector<1x32x32xf32> to vector<32x32xf32>
    %cst_50 = arith.constant dense<0.000000e+00> : vector<8x32xf32>
    %145 = tpu.matmul %127, %144, %cst_50 {dimension_numbers = #tpu.dot_dimension_numbers<[1], [0], [0], [1], [0, 0, 1, 1], [], []>} : vector<8x32xf32>, vector<32x32xf32>, vector<8x32xf32> -> vector<8x32xf32>
    %146 = arith.addf %142, %145 : vector<8x32xf32>
    %147 = vector.extract_strided_slice %3 {offsets = [1, 0, 0], sizes = [1, 1, 32], strides = [1, 1, 1]} : vector<2x1x32xf32> to vector<1x1x32xf32>
    %148 = vector.shape_cast %147 : vector<1x1x32xf32> to vector<1x32xf32>
    %149 = vector.broadcast %148 : vector<1x32xf32> to vector<8x32xf32>
    %150 = arith.addf %146, %149 : vector<8x32xf32>
    %151 = math.tanh %150 : vector<8x32xf32>
    %c6_i32 = arith.constant 6 : i32
    %152 = arith.index_cast %c6_i32 : i32 to index
    %c0_51 = arith.constant 0 : index
    %c0_52 = arith.constant 0 : index
    %153 = vector.load %arg1[%152, %c0_51, %c0_52] : memref<8x8x4xf32, #tpu.memory_space<vmem>>, vector<1x8x4xf32>
    %154 = vector.shape_cast %153 : vector<1x8x4xf32> to vector<8x4xf32>
    %cst_53 = arith.constant dense<0.000000e+00> : vector<8x32xf32>
    %155 = tpu.matmul %154, %0, %cst_53 {dimension_numbers = #tpu.dot_dimension_numbers<[1], [0], [0], [1], [0, 0, 1, 1], [], []>} : vector<8x4xf32>, vector<4x32xf32>, vector<8x32xf32> -> vector<8x32xf32>
    %156 = vector.extract_strided_slice %2 {offsets = [0, 0, 0], sizes = [1, 32, 32], strides = [1, 1, 1]} : vector<2x32x32xf32> to vector<1x32x32xf32>
    %157 = vector.shape_cast %156 : vector<1x32x32xf32> to vector<32x32xf32>
    %cst_54 = arith.constant dense<0.000000e+00> : vector<8x32xf32>
    %158 = tpu.matmul %140, %157, %cst_54 {dimension_numbers = #tpu.dot_dimension_numbers<[1], [0], [0], [1], [0, 0, 1, 1], [], []>} : vector<8x32xf32>, vector<32x32xf32>, vector<8x32xf32> -> vector<8x32xf32>
    %159 = arith.addf %155, %158 : vector<8x32xf32>
    %160 = vector.extract_strided_slice %3 {offsets = [0, 0, 0], sizes = [1, 1, 32], strides = [1, 1, 1]} : vector<2x1x32xf32> to vector<1x1x32xf32>
    %161 = vector.shape_cast %160 : vector<1x1x32xf32> to vector<1x32xf32>
    %162 = vector.broadcast %161 : vector<1x32xf32> to vector<8x32xf32>
    %163 = arith.addf %159, %162 : vector<8x32xf32>
    %164 = math.tanh %163 : vector<8x32xf32>
    %165 = vector.shape_cast %1 : vector<1x32x32xf32> to vector<32x32xf32>
    %cst_55 = arith.constant dense<0.000000e+00> : vector<8x32xf32>
    %166 = tpu.matmul %164, %165, %cst_55 {dimension_numbers = #tpu.dot_dimension_numbers<[1], [0], [0], [1], [0, 0, 1, 1], [], []>} : vector<8x32xf32>, vector<32x32xf32>, vector<8x32xf32> -> vector<8x32xf32>
    %167 = vector.extract_strided_slice %2 {offsets = [1, 0, 0], sizes = [1, 32, 32], strides = [1, 1, 1]} : vector<2x32x32xf32> to vector<1x32x32xf32>
    %168 = vector.shape_cast %167 : vector<1x32x32xf32> to vector<32x32xf32>
    %cst_56 = arith.constant dense<0.000000e+00> : vector<8x32xf32>
    %169 = tpu.matmul %151, %168, %cst_56 {dimension_numbers = #tpu.dot_dimension_numbers<[1], [0], [0], [1], [0, 0, 1, 1], [], []>} : vector<8x32xf32>, vector<32x32xf32>, vector<8x32xf32> -> vector<8x32xf32>
    %170 = arith.addf %166, %169 : vector<8x32xf32>
    %171 = vector.extract_strided_slice %3 {offsets = [1, 0, 0], sizes = [1, 1, 32], strides = [1, 1, 1]} : vector<2x1x32xf32> to vector<1x1x32xf32>
    %172 = vector.shape_cast %171 : vector<1x1x32xf32> to vector<1x32xf32>
    %173 = vector.broadcast %172 : vector<1x32xf32> to vector<8x32xf32>
    %174 = arith.addf %170, %173 : vector<8x32xf32>
    %175 = math.tanh %174 : vector<8x32xf32>
    %c7_i32 = arith.constant 7 : i32
    %176 = arith.index_cast %c7_i32 : i32 to index
    %c0_57 = arith.constant 0 : index
    %c0_58 = arith.constant 0 : index
    %177 = vector.load %arg1[%176, %c0_57, %c0_58] : memref<8x8x4xf32, #tpu.memory_space<vmem>>, vector<1x8x4xf32>
    %178 = vector.shape_cast %177 : vector<1x8x4xf32> to vector<8x4xf32>
    %cst_59 = arith.constant dense<0.000000e+00> : vector<8x32xf32>
    %179 = tpu.matmul %178, %0, %cst_59 {dimension_numbers = #tpu.dot_dimension_numbers<[1], [0], [0], [1], [0, 0, 1, 1], [], []>} : vector<8x4xf32>, vector<4x32xf32>, vector<8x32xf32> -> vector<8x32xf32>
    %180 = vector.extract_strided_slice %2 {offsets = [0, 0, 0], sizes = [1, 32, 32], strides = [1, 1, 1]} : vector<2x32x32xf32> to vector<1x32x32xf32>
    %181 = vector.shape_cast %180 : vector<1x32x32xf32> to vector<32x32xf32>
    %cst_60 = arith.constant dense<0.000000e+00> : vector<8x32xf32>
    %182 = tpu.matmul %164, %181, %cst_60 {dimension_numbers = #tpu.dot_dimension_numbers<[1], [0], [0], [1], [0, 0, 1, 1], [], []>} : vector<8x32xf32>, vector<32x32xf32>, vector<8x32xf32> -> vector<8x32xf32>
    %183 = arith.addf %179, %182 : vector<8x32xf32>
    %184 = vector.extract_strided_slice %3 {offsets = [0, 0, 0], sizes = [1, 1, 32], strides = [1, 1, 1]} : vector<2x1x32xf32> to vector<1x1x32xf32>
    %185 = vector.shape_cast %184 : vector<1x1x32xf32> to vector<1x32xf32>
    %186 = vector.broadcast %185 : vector<1x32xf32> to vector<8x32xf32>
    %187 = arith.addf %183, %186 : vector<8x32xf32>
    %188 = math.tanh %187 : vector<8x32xf32>
    %189 = vector.shape_cast %1 : vector<1x32x32xf32> to vector<32x32xf32>
    %cst_61 = arith.constant dense<0.000000e+00> : vector<8x32xf32>
    %190 = tpu.matmul %188, %189, %cst_61 {dimension_numbers = #tpu.dot_dimension_numbers<[1], [0], [0], [1], [0, 0, 1, 1], [], []>} : vector<8x32xf32>, vector<32x32xf32>, vector<8x32xf32> -> vector<8x32xf32>
    %191 = vector.extract_strided_slice %2 {offsets = [1, 0, 0], sizes = [1, 32, 32], strides = [1, 1, 1]} : vector<2x32x32xf32> to vector<1x32x32xf32>
    %192 = vector.shape_cast %191 : vector<1x32x32xf32> to vector<32x32xf32>
    %cst_62 = arith.constant dense<0.000000e+00> : vector<8x32xf32>
    %193 = tpu.matmul %175, %192, %cst_62 {dimension_numbers = #tpu.dot_dimension_numbers<[1], [0], [0], [1], [0, 0, 1, 1], [], []>} : vector<8x32xf32>, vector<32x32xf32>, vector<8x32xf32> -> vector<8x32xf32>
    %194 = arith.addf %190, %193 : vector<8x32xf32>
    %195 = vector.extract_strided_slice %3 {offsets = [1, 0, 0], sizes = [1, 1, 32], strides = [1, 1, 1]} : vector<2x1x32xf32> to vector<1x1x32xf32>
    %196 = vector.shape_cast %195 : vector<1x1x32xf32> to vector<1x32xf32>
    %197 = vector.broadcast %196 : vector<1x32xf32> to vector<8x32xf32>
    %198 = arith.addf %194, %197 : vector<8x32xf32>
    %199 = math.tanh %198 : vector<8x32xf32>
    %c8_i32 = arith.constant 8 : i32
    %cst_63 = arith.constant dense<0.000000e+00> : vector<8x10xf32>
    %200 = tpu.matmul %199, %4, %cst_63 {dimension_numbers = #tpu.dot_dimension_numbers<[1], [0], [0], [1], [0, 0, 1, 1], [], []>} : vector<8x32xf32>, vector<32x10xf32>, vector<8x10xf32> -> vector<8x10xf32>
    %201 = vector.broadcast %5 : vector<1x10xf32> to vector<8x10xf32>
    %202 = arith.addf %200, %201 : vector<8x10xf32>
    %cst_64 = arith.constant dense<0xFF800000> : vector<8xf32>
    %203 = vector.multi_reduction <maximumf>, %202, %cst_64 [1] : vector<8x10xf32> to vector<8xf32>
    %204 = vector.shape_cast %203 : vector<8xf32> to vector<8x1xf32>
    %205 = vector.broadcast %204 : vector<8x1xf32> to vector<8x10xf32>
    %206 = arith.subf %202, %205 : vector<8x10xf32>
    %207 = math.exp %206 : vector<8x10xf32>
    %cst_65 = arith.constant dense<0.000000e+00> : vector<8xf32>
    %208 = vector.multi_reduction <add>, %207, %cst_65 [1] : vector<8x10xf32> to vector<8xf32>
    %209 = vector.shape_cast %208 : vector<8xf32> to vector<8x1xf32>
    %210 = vector.broadcast %209 : vector<8x1xf32> to vector<8x10xf32>
    %211 = arith.divf %207, %210 : vector<8x10xf32>
    %c0_66 = arith.constant 0 : index
    %c0_67 = arith.constant 0 : index
    %212 = vector.load %arg8[%c0_66, %c0_67] : memref<8x10xf32, #tpu.memory_space<vmem>>, vector<8x10xf32>
    tpu.vector_store %arg8[%c0_66, %c0_67], %211 {strides = array<i32>} : memref<8x10xf32, #tpu.memory_space<vmem>>, vector<8x10xf32>,
    return
  }
  func.func @transform_0(%arg0: i32) -> (i32, i32, i32) {
    %c0_i32 = arith.constant 0 : i32
    %c0_i32_0 = arith.constant 0 : i32
    %c0_i32_1 = arith.constant 0 : i32
    return %c0_i32, %arg0, %c0_i32_0 : i32, i32, i32
  }
  func.func @transform_1(%arg0: i32) -> (i32, i32) {
    %c0_i32 = arith.constant 0 : i32
    %c0_i32_0 = arith.constant 0 : i32
    %c0_i32_1 = arith.constant 0 : i32
    return %c0_i32, %c0_i32_0 : i32, i32
  }
  func.func @transform_2(%arg0: i32) -> (i32, i32, i32) {
    %c0_i32 = arith.constant 0 : i32
    %c0_i32_0 = arith.constant 0 : i32
    %c0_i32_1 = arith.constant 0 : i32
    %c0_i32_2 = arith.constant 0 : i32
    return %c0_i32, %c0_i32_0, %c0_i32_1 : i32, i32, i32
  }
  func.func @transform_3(%arg0: i32) -> (i32, i32, i32) {
    %c0_i32 = arith.constant 0 : i32
    %c0_i32_0 = arith.constant 0 : i32
    %c0_i32_1 = arith.constant 0 : i32
    %c0_i32_2 = arith.constant 0 : i32
    return %c0_i32, %c0_i32_0, %c0_i32_1 : i32, i32, i32
  }
  func.func @transform_4(%arg0: i32) -> (i32, i32, i32) {
    %c0_i32 = arith.constant 0 : i32
    %c0_i32_0 = arith.constant 0 : i32
    %c0_i32_1 = arith.constant 0 : i32
    %c0_i32_2 = arith.constant 0 : i32
    return %c0_i32, %c0_i32_0, %c0_i32_1 : i32, i32, i32
  }
  func.func @transform_5(%arg0: i32) -> (i32, i32) {
    %c0_i32 = arith.constant 0 : i32
    %c0_i32_0 = arith.constant 0 : i32
    %c0_i32_1 = arith.constant 0 : i32
    return %c0_i32, %c0_i32_0 : i32, i32
  }
  func.func @transform_6(%arg0: i32) -> (i32, i32) {
    %c0_i32 = arith.constant 0 : i32
    %c0_i32_0 = arith.constant 0 : i32
    %c0_i32_1 = arith.constant 0 : i32
    return %c0_i32, %c0_i32_0 : i32, i32
  }
  func.func @transform_7(%arg0: i32) -> (i32, i32) {
    %c0_i32 = arith.constant 0 : i32
    %c0_i32_0 = arith.constant 0 : i32
    return %arg0, %c0_i32 : i32, i32
  }
}

</mosaic_0001>

<llo_original>
// kernel: tpu_custom_call.1
$region0: #{tpu_custom_call.1}
  #allocation0 [shape = 'u32[]', space=smem, size = 0x4, offset = 0x4, fixed_abs, tag = 'smem constant byte address 0x4 - core index']
  #allocation1 [shape = 'u32[72,128]{1,0:T(1,128)}', space=vmem, size = 0x9000, scoped, tag = 'internal scratch']
  %s0 = inlined_call_operand.vmem [shape: f32[8,8,4], index: 0, kind: input, shape index: {}]
  %s1 = inlined_call_operand.vmem [shape: f32[4,32], index: 1, kind: input, shape index: {}]
  %s2 = inlined_call_operand.vmem [shape: f32[1,32,32], index: 2, kind: input, shape index: {}]
  %s3 = inlined_call_operand.vmem [shape: f32[2,32,32], index: 3, kind: input, shape index: {}]
  %s4 = inlined_call_operand.vmem [shape: f32[2,1,32], index: 4, kind: input, shape index: {}]
  %s5 = inlined_call_operand.vmem [shape: f32[32,10], index: 5, kind: input, shape index: {}]
  %s6 = inlined_call_operand.vmem [shape: f32[1,10], index: 6, kind: input, shape index: {}]
  %s7 = inlined_call_operand.hbm [shape: f32[8,10], index: 7, kind: output, shape index: {}]
  %s8 = sld [smem:[#allocation0]]
  $region38: #{tpu_custom_call.1} parent=0
    _
  %s10 = ssub.s32 1, %s8
  %s11 = scalar_select 0, %s10, %s8
  $region1: #{tpu_custom_call.1} parent=0
    #allocation2 [shape = 'u8[4096]{0}', space=vmem, size = 0x1000, scoped, tag = 'output window, operand 0, single buffered']
    #allocation3 [shape = 's32[1]{0}', space=sflag, size = 0x4, scoped, tag = 'scoped memory for tpu_custom_call.1']
    %12 = vsyncpa [#allocation3], 0
    // Predicated region
    $region2: #{tpu_custom_call.1} parent=1 // pred_check
      _
    $region3: #{tpu_custom_call.1} parent=1 // pred_check_branch
      %14 = sbr.rel (0) target = $region5
    $region4: #{tpu_custom_call.1} parent=1 // pred_region
      _
    $region5: #{tpu_custom_call.1} parent=1 // pred_fallthru
      _
    // Predicated region
    $region6: #{tpu_custom_call.1} parent=1 // pred_check
      _
    $region7: #{tpu_custom_call.1} parent=1 // pred_check_branch
      %16 = sbr.rel (0) target = $region9
    $region8: #{tpu_custom_call.1} parent=1 // pred_region
      _
    $region9: #{tpu_custom_call.1} parent=1 // pred_fallthru
      _
    // Predicated region
    $region10: #{tpu_custom_call.1} parent=1 // pred_check
      _
    $region11: #{tpu_custom_call.1} parent=1 // pred_check_branch
      %18 = sbr.rel (0) target = $region13
    $region12: #{tpu_custom_call.1} parent=1 // pred_region
      _
    $region13: #{tpu_custom_call.1} parent=1 // pred_fallthru
      _
    // Predicated region
    $region14: #{tpu_custom_call.1} parent=1 // pred_check
      _
    $region15: #{tpu_custom_call.1} parent=1 // pred_check_branch
      %20 = sbr.rel (0) target = $region17
    $region16: #{tpu_custom_call.1} parent=1 // pred_region
      _
    $region17: #{tpu_custom_call.1} parent=1 // pred_fallthru
      _
    // Predicated region
    $region18: #{tpu_custom_call.1} parent=1 // pred_check
      _
    $region19: #{tpu_custom_call.1} parent=1 // pred_check_branch
      %22 = sbr.rel (0) target = $region21
    $region20: #{tpu_custom_call.1} parent=1 // pred_region
      _
    $region21: #{tpu_custom_call.1} parent=1 // pred_fallthru
      _
    // Predicated region
    $region22: #{tpu_custom_call.1} parent=1 // pred_check
      _
    $region23: #{tpu_custom_call.1} parent=1 // pred_check_branch
      %24 = sbr.rel (0) target = $region25
    $region24: #{tpu_custom_call.1} parent=1 // pred_region
      _
    $region25: #{tpu_custom_call.1} parent=1 // pred_fallthru
      _
    // Predicated region
    $region26: #{tpu_custom_call.1} parent=1 // pred_check
      _
    $region27: #{tpu_custom_call.1} parent=1 // pred_check_branch
      %26 = sbr.rel (0) target = $region29
    $region28: #{tpu_custom_call.1} parent=1 // pred_region
      _
    $region29: #{tpu_custom_call.1} parent=1 // pred_fallthru
      _
    %v27 = vld [vmem:[%s1] sm:$0xf]
    %v28 = vld [vmem:[%s2] sm:$0xff]
    %v29 = vld [vmem:[%s2 + $0x8] sm:$0xff]
    %v30 = vld [vmem:[%s2 + $0x10] sm:$0xff]
    %v31 = vld [vmem:[%s2 + $0x18] sm:$0xff]
    %v32 = vld [vmem:[%s3] sm:$0xff]
    %v33 = vld [vmem:[%s3 + $0x8] sm:$0xff]
    %v34 = vld [vmem:[%s3 + $0x10] sm:$0xff]
    %v35 = vld [vmem:[%s3 + $0x18] sm:$0xff]
    %v36 = vld [vmem:[%s3 + $0x20] sm:$0xff]
    %v37 = vld [vmem:[%s3 + $0x28] sm:$0xff]
    %v38 = vld [vmem:[%s3 + $0x30] sm:$0xff]
    %v39 = vld [vmem:[%s3 + $0x38] sm:$0xff]
    %v40 = vld [vmem:[%s4] sm:$0x1]
    %v41 = vld [vmem:[%s4 + $0x1] sm:$0x1]
    %v42 = vld [vmem:[%s5] sm:$0xff]
    %v43 = vld [vmem:[%s5 + $0x8] sm:$0xff]
    %v44 = vld [vmem:[%s5 + $0x10] sm:$0xff]
    %v45 = vld [vmem:[%s5 + $0x18] sm:$0xff]
    %v46 = vld [vmem:[%s6] sm:$0x1]
    %v47 = vld [vmem:[%s0] sm:$0xff]
    %vm48 = vcmask 261120
    %v50 = vsel %vm48, 0.0, 0
    %52 = vmatpush.msra.mxu0 0.0
    %53 = vmatpush.msra.mxu0 0.0
    %54 = vmatpush.msra.mxu0 0.0
    %55 = vmatpush.msra.mxu0 0.0
    %56 = vmatpush.msra.mxu0 0.0
    %57 = vmatpush.msra.mxu0 0.0
    %58 = vmatpush.msra.mxu0 0.0
    %59 = vmatpush.msra.mxu0 0.0
    %60 = vmatpush.msra.mxu0 0.0
    %61 = vmatpush.msra.mxu0 0.0
    %62 = vmatpush.msra.mxu0 0.0
    %63 = vmatpush.msra.mxu0 0.0
    %64 = vmatpush.msra.mxu0 %v35
    %65 = vmatpush.msra.mxu0 %v34
    %66 = vmatpush.msra.mxu0 %v33
    %67 = vmatpush.msra.mxu0 %v32
    %68 = vmatmul.f32.gmra.mxu0 %v50
    %v69 = vpop.f32.mrf.mxu0
    %v70 = vadd.f32 0.0, %v69
    %71 = vdwg.mxu0
    %vm72 = vcmask 31744
    %v74 = vsel %vm72, %v47, 0
    %vm76 = vcmask 1043456
    %v78 = vsel %vm76, %v27, 0
    %80 = vmatpush.msra.mxu0 0.0
    %81 = vmatpush.msra.mxu0 0.0
    %82 = vmatpush.msra.mxu0 0.0
    %83 = vmatpush.msra.mxu0 0.0
    %84 = vmatpush.msra.mxu0 0.0
    %85 = vmatpush.msra.mxu0 0.0
    %86 = vmatpush.msra.mxu0 0.0
    %87 = vmatpush.msra.mxu0 0.0
    %88 = vmatpush.msra.mxu0 0.0
    %89 = vmatpush.msra.mxu0 0.0
    %90 = vmatpush.msra.mxu0 0.0
    %91 = vmatpush.msra.mxu0 0.0
    %92 = vmatpush.msra.mxu0 0.0
    %93 = vmatpush.msra.mxu0 0.0
    %94 = vmatpush.msra.mxu0 0.0
    %95 = vmatpush.msra.mxu0 %v78
    %96 = vmatmul.f32.gmra.mxu0 %v74
    %v97 = vpop.f32.mrf.mxu0
    %v98 = vadd.f32 %v70, %v97
    %99 = vdwg.mxu0
    %v101 = vperm.slane %v40, 0
    %v103 = vadd.f32 %v98, %v101
    %v104 = vtanh.pop %v103
    %105 = vmatpush.msra.mxu0 0.0
    %106 = vmatpush.msra.mxu0 0.0
    %107 = vmatpush.msra.mxu0 0.0
    %108 = vmatpush.msra.mxu0 0.0
    %109 = vmatpush.msra.mxu0 0.0
    %110 = vmatpush.msra.mxu0 0.0
    %111 = vmatpush.msra.mxu0 0.0
    %112 = vmatpush.msra.mxu0 0.0
    %113 = vmatpush.msra.mxu0 0.0
    %114 = vmatpush.msra.mxu0 0.0
    %115 = vmatpush.msra.mxu0 0.0
    %116 = vmatpush.msra.mxu0 0.0
    %117 = vmatpush.msra.mxu0 %v39
    %118 = vmatpush.msra.mxu0 %v38
    %119 = vmatpush.msra.mxu0 %v37
    %120 = vmatpush.msra.mxu0 %v36
    %121 = vmatmul.f32.gmra.mxu0 %v50
    %v122 = vpop.f32.mrf.mxu0
    %v123 = vadd.f32 0.0, %v122
    %124 = vdwg.mxu0
    %v126 = vsel %vm48, %v104, 0
    %128 = vmatpush.msra.mxu0 0.0
    %129 = vmatpush.msra.mxu0 0.0
    %130 = vmatpush.msra.mxu0 0.0
    %131 = vmatpush.msra.mxu0 0.0
    %132 = vmatpush.msra.mxu0 0.0
    %133 = vmatpush.msra.mxu0 0.0
    %134 = vmatpush.msra.mxu0 0.0
    %135 = vmatpush.msra.mxu0 0.0
    %136 = vmatpush.msra.mxu0 0.0
    %137 = vmatpush.msra.mxu0 0.0
    %138 = vmatpush.msra.mxu0 0.0
    %139 = vmatpush.msra.mxu0 0.0
    %140 = vmatpush.msra.mxu0 %v31
    %141 = vmatpush.msra.mxu0 %v30
    %142 = vmatpush.msra.mxu0 %v29
    %143 = vmatpush.msra.mxu0 %v28
    %144 = vmatmul.f32.gmra.mxu0 %v126
    %v145 = vpop.f32.mrf.mxu0
    %v146 = vadd.f32 %v123, %v145
    %147 = vdwg.mxu0
    %v149 = vperm.slane %v41, 0
    %v151 = vadd.f32 %v146, %v149
    %v152 = vtanh.pop %v151
    %s153 = scalar_lea.vmem %s0, 8
    %v154 = vld [vmem:[%s153] sm:$0xff]
    %155 = vmatpush.msra.mxu0 0.0
    %156 = vmatpush.msra.mxu0 0.0
    %157 = vmatpush.msra.mxu0 0.0
    %158 = vmatpush.msra.mxu0 0.0
    %159 = vmatpush.msra.mxu0 0.0
    %160 = vmatpush.msra.mxu0 0.0
    %161 = vmatpush.msra.mxu0 0.0
    %162 = vmatpush.msra.mxu0 0.0
    %163 = vmatpush.msra.mxu0 0.0
    %164 = vmatpush.msra.mxu0 0.0
    %165 = vmatpush.msra.mxu0 0.0
    %166 = vmatpush.msra.mxu0 0.0
    %167 = vmatpush.msra.mxu0 %v35
    %168 = vmatpush.msra.mxu0 %v34
    %169 = vmatpush.msra.mxu0 %v33
    %170 = vmatpush.msra.mxu0 %v32
    %171 = vmatmul.f32.gmra.mxu0 %v126
    %v172 = vpop.f32.mrf.mxu0
    %v173 = vadd.f32 0.0, %v172
    %174 = vdwg.mxu0
    %v176 = vsel %vm72, %v154, 0
    %178 = vmatpush.msra.mxu0 0.0
    %179 = vmatpush.msra.mxu0 0.0
    %180 = vmatpush.msra.mxu0 0.0
    %181 = vmatpush.msra.mxu0 0.0
    %182 = vmatpush.msra.mxu0 0.0
    %183 = vmatpush.msra.mxu0 0.0
    %184 = vmatpush.msra.mxu0 0.0
    %185 = vmatpush.msra.mxu0 0.0
    %186 = vmatpush.msra.mxu0 0.0
    %187 = vmatpush.msra.mxu0 0.0
    %188 = vmatpush.msra.mxu0 0.0
    %189 = vmatpush.msra.mxu0 0.0
    %190 = vmatpush.msra.mxu0 0.0
    %191 = vmatpush.msra.mxu0 0.0
    %192 = vmatpush.msra.mxu0 0.0
    %193 = vmatpush.msra.mxu0 %v78
    %194 = vmatmul.f32.gmra.mxu0 %v176
    %v195 = vpop.f32.mrf.mxu0
    %v196 = vadd.f32 %v173, %v195
    %197 = vdwg.mxu0
    %v198 = vadd.f32 %v196, %v101
    %v199 = vtanh.pop %v198
    %v201 = vsel %vm48, %v152, 0
    %203 = vmatpush.msra.mxu0 0.0
    %204 = vmatpush.msra.mxu0 0.0
    %205 = vmatpush.msra.mxu0 0.0
    %206 = vmatpush.msra.mxu0 0.0
    %207 = vmatpush.msra.mxu0 0.0
    %208 = vmatpush.msra.mxu0 0.0
    %209 = vmatpush.msra.mxu0 0.0
    %210 = vmatpush.msra.mxu0 0.0
    %211 = vmatpush.msra.mxu0 0.0
    %212 = vmatpush.msra.mxu0 0.0
    %213 = vmatpush.msra.mxu0 0.0
    %214 = vmatpush.msra.mxu0 0.0
    %215 = vmatpush.msra.mxu0 %v39
    %216 = vmatpush.msra.mxu0 %v38
    %217 = vmatpush.msra.mxu0 %v37
    %218 = vmatpush.msra.mxu0 %v36
    %219 = vmatmul.f32.gmra.mxu0 %v201
    %v220 = vpop.f32.mrf.mxu0
    %v221 = vadd.f32 0.0, %v220
    %222 = vdwg.mxu0
    %v224 = vsel %vm48, %v199, 0
    %226 = vmatpush.msra.mxu0 0.0
    %227 = vmatpush.msra.mxu0 0.0
    %228 = vmatpush.msra.mxu0 0.0
    %229 = vmatpush.msra.mxu0 0.0
    %230 = vmatpush.msra.mxu0 0.0
    %231 = vmatpush.msra.mxu0 0.0
    %232 = vmatpush.msra.mxu0 0.0
    %233 = vmatpush.msra.mxu0 0.0
    %234 = vmatpush.msra.mxu0 0.0
    %235 = vmatpush.msra.mxu0 0.0
    %236 = vmatpush.msra.mxu0 0.0
    %237 = vmatpush.msra.mxu0 0.0
    %238 = vmatpush.msra.mxu0 %v31
    %239 = vmatpush.msra.mxu0 %v30
    %240 = vmatpush.msra.mxu0 %v29
    %241 = vmatpush.msra.mxu0 %v28
    %242 = vmatmul.f32.gmra.mxu0 %v224
    %v243 = vpop.f32.mrf.mxu0
    %v244 = vadd.f32 %v221, %v243
    %245 = vdwg.mxu0
    %v246 = vadd.f32 %v244, %v149
    %v247 = vtanh.pop %v246
    %s248 = scalar_lea.vmem %s0, 16
    %v249 = vld [vmem:[%s248] sm:$0xff]
    %250 = vmatpush.msra.mxu0 0.0
    %251 = vmatpush.msra.mxu0 0.0
    %252 = vmatpush.msra.mxu0 0.0
    %253 = vmatpush.msra.mxu0 0.0
    %254 = vmatpush.msra.mxu0 0.0
    %255 = vmatpush.msra.mxu0 0.0
    %256 = vmatpush.msra.mxu0 0.0
    %257 = vmatpush.msra.mxu0 0.0
    %258 = vmatpush.msra.mxu0 0.0
    %259 = vmatpush.msra.mxu0 0.0
    %260 = vmatpush.msra.mxu0 0.0
    %261 = vmatpush.msra.mxu0 0.0
    %262 = vmatpush.msra.mxu0 %v35
    %263 = vmatpush.msra.mxu0 %v34
    %264 = vmatpush.msra.mxu0 %v33
    %265 = vmatpush.msra.mxu0 %v32
    %266 = vmatmul.f32.gmra.mxu0 %v224
    %v267 = vpop.f32.mrf.mxu0
    %v268 = vadd.f32 0.0, %v267
    %269 = vdwg.mxu0
    %v271 = vsel %vm72, %v249, 0
    %273 = vmatpush.msra.mxu0 0.0
    %274 = vmatpush.msra.mxu0 0.0
    %275 = vmatpush.msra.mxu0 0.0
    %276 = vmatpush.msra.mxu0 0.0
    %277 = vmatpush.msra.mxu0 0.0
    %278 = vmatpush.msra.mxu0 0.0
    %279 = vmatpush.msra.mxu0 0.0
    %280 = vmatpush.msra.mxu0 0.0
    %281 = vmatpush.msra.mxu0 0.0
    %282 = vmatpush.msra.mxu0 0.0
    %283 = vmatpush.msra.mxu0 0.0
    %284 = vmatpush.msra.mxu0 0.0
    %285 = vmatpush.msra.mxu0 0.0
    %286 = vmatpush.msra.mxu0 0.0
    %287 = vmatpush.msra.mxu0 0.0
    %288 = vmatpush.msra.mxu0 %v78
    %289 = vmatmul.f32.gmra.mxu0 %v271
    %v290 = vpop.f32.mrf.mxu0
    %v291 = vadd.f32 %v268, %v290
    %292 = vdwg.mxu0
    %v293 = vadd.f32 %v291, %v101
    %v294 = vtanh.pop %v293
    %v296 = vsel %vm48, %v247, 0
    %298 = vmatpush.msra.mxu0 0.0
    %299 = vmatpush.msra.mxu0 0.0
    %300 = vmatpush.msra.mxu0 0.0
    %301 = vmatpush.msra.mxu0 0.0
    %302 = vmatpush.msra.mxu0 0.0
    %303 = vmatpush.msra.mxu0 0.0
    %304 = vmatpush.msra.mxu0 0.0
    %305 = vmatpush.msra.mxu0 0.0
    %306 = vmatpush.msra.mxu0 0.0
    %307 = vmatpush.msra.mxu0 0.0
    %308 = vmatpush.msra.mxu0 0.0
    %309 = vmatpush.msra.mxu0 0.0
    %310 = vmatpush.msra.mxu0 %v39
    %311 = vmatpush.msra.mxu0 %v38
    %312 = vmatpush.msra.mxu0 %v37
    %313 = vmatpush.msra.mxu0 %v36
    %314 = vmatmul.f32.gmra.mxu0 %v296
    %v315 = vpop.f32.mrf.mxu0
    %v316 = vadd.f32 0.0, %v315
    %317 = vdwg.mxu0
    %v319 = vsel %vm48, %v294, 0
    %321 = vmatpush.msra.mxu0 0.0
    %322 = vmatpush.msra.mxu0 0.0
    %323 = vmatpush.msra.mxu0 0.0
    %324 = vmatpush.msra.mxu0 0.0
    %325 = vmatpush.msra.mxu0 0.0
    %326 = vmatpush.msra.mxu0 0.0
    %327 = vmatpush.msra.mxu0 0.0
    %328 = vmatpush.msra.mxu0 0.0
    %329 = vmatpush.msra.mxu0 0.0
    %330 = vmatpush.msra.mxu0 0.0
    %331 = vmatpush.msra.mxu0 0.0
    %332 = vmatpush.msra.mxu0 0.0
    %333 = vmatpush.msra.mxu0 %v31
    %334 = vmatpush.msra.mxu0 %v30
    %335 = vmatpush.msra.mxu0 %v29
    %336 = vmatpush.msra.mxu0 %v28
    %337 = vmatmul.f32.gmra.mxu0 %v319
    %v338 = vpop.f32.mrf.mxu0
    %v339 = vadd.f32 %v316, %v338
    %340 = vdwg.mxu0
    %v341 = vadd.f32 %v339, %v149
    %v342 = vtanh.pop %v341
    %s343 = scalar_lea.vmem %s0, 24
    %v344 = vld [vmem:[%s343] sm:$0xff]
    %345 = vmatpush.msra.mxu0 0.0
    %346 = vmatpush.msra.mxu0 0.0
    %347 = vmatpush.msra.mxu0 0.0
    %348 = vmatpush.msra.mxu0 0.0
    %349 = vmatpush.msra.mxu0 0.0
    %350 = vmatpush.msra.mxu0 0.0
    %351 = vmatpush.msra.mxu0 0.0
    %352 = vmatpush.msra.mxu0 0.0
    %353 = vmatpush.msra.mxu0 0.0
    %354 = vmatpush.msra.mxu0 0.0
    %355 = vmatpush.msra.mxu0 0.0
    %356 = vmatpush.msra.mxu0 0.0
    %357 = vmatpush.msra.mxu0 %v35
    %358 = vmatpush.msra.mxu0 %v34
    %359 = vmatpush.msra.mxu0 %v33
    %360 = vmatpush.msra.mxu0 %v32
    %361 = vmatmul.f32.gmra.mxu0 %v319
    %v362 = vpop.f32.mrf.mxu0
    %v363 = vadd.f32 0.0, %v362
    %364 = vdwg.mxu0
    %v366 = vsel %vm72, %v344, 0
    %368 = vmatpush.msra.mxu0 0.0
    %369 = vmatpush.msra.mxu0 0.0
    %370 = vmatpush.msra.mxu0 0.0
    %371 = vmatpush.msra.mxu0 0.0
    %372 = vmatpush.msra.mxu0 0.0
    %373 = vmatpush.msra.mxu0 0.0
    %374 = vmatpush.msra.mxu0 0.0
    %375 = vmatpush.msra.mxu0 0.0
    %376 = vmatpush.msra.mxu0 0.0
    %377 = vmatpush.msra.mxu0 0.0
    %378 = vmatpush.msra.mxu0 0.0
    %379 = vmatpush.msra.mxu0 0.0
    %380 = vmatpush.msra.mxu0 0.0
    %381 = vmatpush.msra.mxu0 0.0
    %382 = vmatpush.msra.mxu0 0.0
    %383 = vmatpush.msra.mxu0 %v78
    %384 = vmatmul.f32.gmra.mxu0 %v366
    %v385 = vpop.f32.mrf.mxu0
    %v386 = vadd.f32 %v363, %v385
    %387 = vdwg.mxu0
    %v388 = vadd.f32 %v386, %v101
    %v389 = vtanh.pop %v388
    %v391 = vsel %vm48, %v342, 0
    %393 = vmatpush.msra.mxu0 0.0
    %394 = vmatpush.msra.mxu0 0.0
    %395 = vmatpush.msra.mxu0 0.0
    %396 = vmatpush.msra.mxu0 0.0
    %397 = vmatpush.msra.mxu0 0.0
    %398 = vmatpush.msra.mxu0 0.0
    %399 = vmatpush.msra.mxu0 0.0
    %400 = vmatpush.msra.mxu0 0.0
    %401 = vmatpush.msra.mxu0 0.0
    %402 = vmatpush.msra.mxu0 0.0
    %403 = vmatpush.msra.mxu0 0.0
    %404 = vmatpush.msra.mxu0 0.0
    %405 = vmatpush.msra.mxu0 %v39
    %406 = vmatpush.msra.mxu0 %v38
    %407 = vmatpush.msra.mxu0 %v37
    %408 = vmatpush.msra.mxu0 %v36
    %409 = vmatmul.f32.gmra.mxu0 %v391
    %v410 = vpop.f32.mrf.mxu0
    %v411 = vadd.f32 0.0, %v410
    %412 = vdwg.mxu0
    %v414 = vsel %vm48, %v389, 0
    %416 = vmatpush.msra.mxu0 0.0
    %417 = vmatpush.msra.mxu0 0.0
    %418 = vmatpush.msra.mxu0 0.0
    %419 = vmatpush.msra.mxu0 0.0
    %420 = vmatpush.msra.mxu0 0.0
    %421 = vmatpush.msra.mxu0 0.0
    %422 = vmatpush.msra.mxu0 0.0
    %423 = vmatpush.msra.mxu0 0.0
    %424 = vmatpush.msra.mxu0 0.0
    %425 = vmatpush.msra.mxu0 0.0
    %426 = vmatpush.msra.mxu0 0.0
    %427 = vmatpush.msra.mxu0 0.0
    %428 = vmatpush.msra.mxu0 %v31
    %429 = vmatpush.msra.mxu0 %v30
    %430 = vmatpush.msra.mxu0 %v29
    %431 = vmatpush.msra.mxu0 %v28
    %432 = vmatmul.f32.gmra.mxu0 %v414
    %v433 = vpop.f32.mrf.mxu0
    %v434 = vadd.f32 %v411, %v433
    %435 = vdwg.mxu0
    %v436 = vadd.f32 %v434, %v149
    %v437 = vtanh.pop %v436
    %s438 = scalar_lea.vmem %s0, 32
    %v439 = vld [vmem:[%s438] sm:$0xff]
    %440 = vmatpush.msra.mxu0 0.0
    %441 = vmatpush.msra.mxu0 0.0
    %442 = vmatpush.msra.mxu0 0.0
    %443 = vmatpush.msra.mxu0 0.0
    %444 = vmatpush.msra.mxu0 0.0
    %445 = vmatpush.msra.mxu0 0.0
    %446 = vmatpush.msra.mxu0 0.0
    %447 = vmatpush.msra.mxu0 0.0
    %448 = vmatpush.msra.mxu0 0.0
    %449 = vmatpush.msra.mxu0 0.0
    %450 = vmatpush.msra.mxu0 0.0
    %451 = vmatpush.msra.mxu0 0.0
    %452 = vmatpush.msra.mxu0 %v35
    %453 = vmatpush.msra.mxu0 %v34
    %454 = vmatpush.msra.mxu0 %v33
    %455 = vmatpush.msra.mxu0 %v32
    %456 = vmatmul.f32.gmra.mxu0 %v414
    %v457 = vpop.f32.mrf.mxu0
    %v458 = vadd.f32 0.0, %v457
    %459 = vdwg.mxu0
    %v461 = vsel %vm72, %v439, 0
    %463 = vmatpush.msra.mxu0 0.0
    %464 = vmatpush.msra.mxu0 0.0
    %465 = vmatpush.msra.mxu0 0.0
    %466 = vmatpush.msra.mxu0 0.0
    %467 = vmatpush.msra.mxu0 0.0
    %468 = vmatpush.msra.mxu0 0.0
    %469 = vmatpush.msra.mxu0 0.0
    %470 = vmatpush.msra.mxu0 0.0
    %471 = vmatpush.msra.mxu0 0.0
    %472 = vmatpush.msra.mxu0 0.0
    %473 = vmatpush.msra.mxu0 0.0
    %474 = vmatpush.msra.mxu0 0.0
    %475 = vmatpush.msra.mxu0 0.0
    %476 = vmatpush.msra.mxu0 0.0
    %477 = vmatpush.msra.mxu0 0.0
    %478 = vmatpush.msra.mxu0 %v78
    %479 = vmatmul.f32.gmra.mxu0 %v461
    %v480 = vpop.f32.mrf.mxu0
    %v481 = vadd.f32 %v458, %v480
    %482 = vdwg.mxu0
    %v483 = vadd.f32 %v481, %v101
    %v484 = vtanh.pop %v483
    %v486 = vsel %vm48, %v437, 0
    %488 = vmatpush.msra.mxu0 0.0
    %489 = vmatpush.msra.mxu0 0.0
    %490 = vmatpush.msra.mxu0 0.0
    %491 = vmatpush.msra.mxu0 0.0
    %492 = vmatpush.msra.mxu0 0.0
    %493 = vmatpush.msra.mxu0 0.0
    %494 = vmatpush.msra.mxu0 0.0
    %495 = vmatpush.msra.mxu0 0.0
    %496 = vmatpush.msra.mxu0 0.0
    %497 = vmatpush.msra.mxu0 0.0
    %498 = vmatpush.msra.mxu0 0.0
    %499 = vmatpush.msra.mxu0 0.0
    %500 = vmatpush.msra.mxu0 %v39
    %501 = vmatpush.msra.mxu0 %v38
    %502 = vmatpush.msra.mxu0 %v37
    %503 = vmatpush.msra.mxu0 %v36
    %504 = vmatmul.f32.gmra.mxu0 %v486
    %v505 = vpop.f32.mrf.mxu0
    %v506 = vadd.f32 0.0, %v505
    %507 = vdwg.mxu0
    %v509 = vsel %vm48, %v484, 0
    %511 = vmatpush.msra.mxu0 0.0
    %512 = vmatpush.msra.mxu0 0.0
    %513 = vmatpush.msra.mxu0 0.0
    %514 = vmatpush.msra.mxu0 0.0
    %515 = vmatpush.msra.mxu0 0.0
    %516 = vmatpush.msra.mxu0 0.0
    %517 = vmatpush.msra.mxu0 0.0
    %518 = vmatpush.msra.mxu0 0.0
    %519 = vmatpush.msra.mxu0 0.0
    %520 = vmatpush.msra.mxu0 0.0
    %521 = vmatpush.msra.mxu0 0.0
    %522 = vmatpush.msra.mxu0 0.0
    %523 = vmatpush.msra.mxu0 %v31
    %524 = vmatpush.msra.mxu0 %v30
    %525 = vmatpush.msra.mxu0 %v29
    %526 = vmatpush.msra.mxu0 %v28
    %527 = vmatmul.f32.gmra.mxu0 %v509
    %v528 = vpop.f32.mrf.mxu0
    %v529 = vadd.f32 %v506, %v528
    %530 = vdwg.mxu0
    %v531 = vadd.f32 %v529, %v149
    %v532 = vtanh.pop %v531
    %s533 = scalar_lea.vmem %s0, 40
    %v534 = vld [vmem:[%s533] sm:$0xff]
    %535 = vmatpush.msra.mxu0 0.0
    %536 = vmatpush.msra.mxu0 0.0
    %537 = vmatpush.msra.mxu0 0.0
    %538 = vmatpush.msra.mxu0 0.0
    %539 = vmatpush.msra.mxu0 0.0
    %540 = vmatpush.msra.mxu0 0.0
    %541 = vmatpush.msra.mxu0 0.0
    %542 = vmatpush.msra.mxu0 0.0
    %543 = vmatpush.msra.mxu0 0.0
    %544 = vmatpush.msra.mxu0 0.0
    %545 = vmatpush.msra.mxu0 0.0
    %546 = vmatpush.msra.mxu0 0.0
    %547 = vmatpush.msra.mxu0 %v35
    %548 = vmatpush.msra.mxu0 %v34
    %549 = vmatpush.msra.mxu0 %v33
    %550 = vmatpush.msra.mxu0 %v32
    %551 = vmatmul.f32.gmra.mxu0 %v509
    %v552 = vpop.f32.mrf.mxu0
    %v553 = vadd.f32 0.0, %v552
    %554 = vdwg.mxu0
    %v556 = vsel %vm72, %v534, 0
    %558 = vmatpush.msra.mxu0 0.0
    %559 = vmatpush.msra.mxu0 0.0
    %560 = vmatpush.msra.mxu0 0.0
    %561 = vmatpush.msra.mxu0 0.0
    %562 = vmatpush.msra.mxu0 0.0
    %563 = vmatpush.msra.mxu0 0.0
    %564 = vmatpush.msra.mxu0 0.0
    %565 = vmatpush.msra.mxu0 0.0
    %566 = vmatpush.msra.mxu0 0.0
    %567 = vmatpush.msra.mxu0 0.0
    %568 = vmatpush.msra.mxu0 0.0
    %569 = vmatpush.msra.mxu0 0.0
    %570 = vmatpush.msra.mxu0 0.0
    %571 = vmatpush.msra.mxu0 0.0
    %572 = vmatpush.msra.mxu0 0.0
    %573 = vmatpush.msra.mxu0 %v78
    %574 = vmatmul.f32.gmra.mxu0 %v556
    %v575 = vpop.f32.mrf.mxu0
    %v576 = vadd.f32 %v553, %v575
    %577 = vdwg.mxu0
    %v578 = vadd.f32 %v576, %v101
    %v579 = vtanh.pop %v578
    %v581 = vsel %vm48, %v532, 0
    %583 = vmatpush.msra.mxu0 0.0
    %584 = vmatpush.msra.mxu0 0.0
    %585 = vmatpush.msra.mxu0 0.0
    %586 = vmatpush.msra.mxu0 0.0
    %587 = vmatpush.msra.mxu0 0.0
    %588 = vmatpush.msra.mxu0 0.0
    %589 = vmatpush.msra.mxu0 0.0
    %590 = vmatpush.msra.mxu0 0.0
    %591 = vmatpush.msra.mxu0 0.0
    %592 = vmatpush.msra.mxu0 0.0
    %593 = vmatpush.msra.mxu0 0.0
    %594 = vmatpush.msra.mxu0 0.0
    %595 = vmatpush.msra.mxu0 %v39
    %596 = vmatpush.msra.mxu0 %v38
    %597 = vmatpush.msra.mxu0 %v37
    %598 = vmatpush.msra.mxu0 %v36
    %599 = vmatmul.f32.gmra.mxu0 %v581
    %v600 = vpop.f32.mrf.mxu0
    %v601 = vadd.f32 0.0, %v600
    %602 = vdwg.mxu0
    %v604 = vsel %vm48, %v579, 0
    %606 = vmatpush.msra.mxu0 0.0
    %607 = vmatpush.msra.mxu0 0.0
    %608 = vmatpush.msra.mxu0 0.0
    %609 = vmatpush.msra.mxu0 0.0
    %610 = vmatpush.msra.mxu0 0.0
    %611 = vmatpush.msra.mxu0 0.0
    %612 = vmatpush.msra.mxu0 0.0
    %613 = vmatpush.msra.mxu0 0.0
    %614 = vmatpush.msra.mxu0 0.0
    %615 = vmatpush.msra.mxu0 0.0
    %616 = vmatpush.msra.mxu0 0.0
    %617 = vmatpush.msra.mxu0 0.0
    %618 = vmatpush.msra.mxu0 %v31
    %619 = vmatpush.msra.mxu0 %v30
    %620 = vmatpush.msra.mxu0 %v29
    %621 = vmatpush.msra.mxu0 %v28
    %622 = vmatmul.f32.gmra.mxu0 %v604
    %v623 = vpop.f32.mrf.mxu0
    %v624 = vadd.f32 %v601, %v623
    %625 = vdwg.mxu0
    %v626 = vadd.f32 %v624, %v149
    %v627 = vtanh.pop %v626
    %s628 = scalar_lea.vmem %s0, 48
    %v629 = vld [vmem:[%s628] sm:$0xff]
    %630 = vmatpush.msra.mxu0 0.0
    %631 = vmatpush.msra.mxu0 0.0
    %632 = vmatpush.msra.mxu0 0.0
    %633 = vmatpush.msra.mxu0 0.0
    %634 = vmatpush.msra.mxu0 0.0
    %635 = vmatpush.msra.mxu0 0.0
    %636 = vmatpush.msra.mxu0 0.0
    %637 = vmatpush.msra.mxu0 0.0
    %638 = vmatpush.msra.mxu0 0.0
    %639 = vmatpush.msra.mxu0 0.0
    %640 = vmatpush.msra.mxu0 0.0
    %641 = vmatpush.msra.mxu0 0.0
    %642 = vmatpush.msra.mxu0 %v35
    %643 = vmatpush.msra.mxu0 %v34
    %644 = vmatpush.msra.mxu0 %v33
    %645 = vmatpush.msra.mxu0 %v32
    %646 = vmatmul.f32.gmra.mxu0 %v604
    %v647 = vpop.f32.mrf.mxu0
    %v648 = vadd.f32 0.0, %v647
    %649 = vdwg.mxu0
    %v651 = vsel %vm72, %v629, 0
    %653 = vmatpush.msra.mxu0 0.0
    %654 = vmatpush.msra.mxu0 0.0
    %655 = vmatpush.msra.mxu0 0.0
    %656 = vmatpush.msra.mxu0 0.0
    %657 = vmatpush.msra.mxu0 0.0
    %658 = vmatpush.msra.mxu0 0.0
    %659 = vmatpush.msra.mxu0 0.0
    %660 = vmatpush.msra.mxu0 0.0
    %661 = vmatpush.msra.mxu0 0.0
    %662 = vmatpush.msra.mxu0 0.0
    %663 = vmatpush.msra.mxu0 0.0
    %664 = vmatpush.msra.mxu0 0.0
    %665 = vmatpush.msra.mxu0 0.0
    %666 = vmatpush.msra.mxu0 0.0
    %667 = vmatpush.msra.mxu0 0.0
    %668 = vmatpush.msra.mxu0 %v78
    %669 = vmatmul.f32.gmra.mxu0 %v651
    %v670 = vpop.f32.mrf.mxu0
    %v671 = vadd.f32 %v648, %v670
    %672 = vdwg.mxu0
    %v673 = vadd.f32 %v671, %v101
    %v674 = vtanh.pop %v673
    %v676 = vsel %vm48, %v627, 0
    %678 = vmatpush.msra.mxu0 0.0
    %679 = vmatpush.msra.mxu0 0.0
    %680 = vmatpush.msra.mxu0 0.0
    %681 = vmatpush.msra.mxu0 0.0
    %682 = vmatpush.msra.mxu0 0.0
    %683 = vmatpush.msra.mxu0 0.0
    %684 = vmatpush.msra.mxu0 0.0
    %685 = vmatpush.msra.mxu0 0.0
    %686 = vmatpush.msra.mxu0 0.0
    %687 = vmatpush.msra.mxu0 0.0
    %688 = vmatpush.msra.mxu0 0.0
    %689 = vmatpush.msra.mxu0 0.0
    %690 = vmatpush.msra.mxu0 %v39
    %691 = vmatpush.msra.mxu0 %v38
    %692 = vmatpush.msra.mxu0 %v37
    %693 = vmatpush.msra.mxu0 %v36
    %694 = vmatmul.f32.gmra.mxu0 %v676
    %v695 = vpop.f32.mrf.mxu0
    %v696 = vadd.f32 0.0, %v695
    %697 = vdwg.mxu0
    %v699 = vsel %vm48, %v674, 0
    %701 = vmatpush.msra.mxu0 0.0
    %702 = vmatpush.msra.mxu0 0.0
    %703 = vmatpush.msra.mxu0 0.0
    %704 = vmatpush.msra.mxu0 0.0
    %705 = vmatpush.msra.mxu0 0.0
    %706 = vmatpush.msra.mxu0 0.0
    %707 = vmatpush.msra.mxu0 0.0
    %708 = vmatpush.msra.mxu0 0.0
    %709 = vmatpush.msra.mxu0 0.0
    %710 = vmatpush.msra.mxu0 0.0
    %711 = vmatpush.msra.mxu0 0.0
    %712 = vmatpush.msra.mxu0 0.0
    %713 = vmatpush.msra.mxu0 %v31
    %714 = vmatpush.msra.mxu0 %v30
    %715 = vmatpush.msra.mxu0 %v29
    %716 = vmatpush.msra.mxu0 %v28
    %717 = vmatmul.f32.gmra.mxu0 %v699
    %v718 = vpop.f32.mrf.mxu0
    %v719 = vadd.f32 %v696, %v718
    %720 = vdwg.mxu0
    %v721 = vadd.f32 %v719, %v149
    %v722 = vtanh.pop %v721
    %s723 = scalar_lea.vmem %s0, 56
    %v724 = vld [vmem:[%s723] sm:$0xff]
    %725 = vmatpush.msra.mxu0 0.0
    %726 = vmatpush.msra.mxu0 0.0
    %727 = vmatpush.msra.mxu0 0.0
    %728 = vmatpush.msra.mxu0 0.0
    %729 = vmatpush.msra.mxu0 0.0
    %730 = vmatpush.msra.mxu0 0.0
    %731 = vmatpush.msra.mxu0 0.0
    %732 = vmatpush.msra.mxu0 0.0
    %733 = vmatpush.msra.mxu0 0.0
    %734 = vmatpush.msra.mxu0 0.0
    %735 = vmatpush.msra.mxu0 0.0
    %736 = vmatpush.msra.mxu0 0.0
    %737 = vmatpush.msra.mxu0 %v35
    %738 = vmatpush.msra.mxu0 %v34
    %739 = vmatpush.msra.mxu0 %v33
    %740 = vmatpush.msra.mxu0 %v32
    %741 = vmatmul.f32.gmra.mxu0 %v699
    %v742 = vpop.f32.mrf.mxu0
    %v743 = vadd.f32 0.0, %v742
    %744 = vdwg.mxu0
    %v746 = vsel %vm72, %v724, 0
    %748 = vmatpush.msra.mxu0 0.0
    %749 = vmatpush.msra.mxu0 0.0
    %750 = vmatpush.msra.mxu0 0.0
    %751 = vmatpush.msra.mxu0 0.0
    %752 = vmatpush.msra.mxu0 0.0
    %753 = vmatpush.msra.mxu0 0.0
    %754 = vmatpush.msra.mxu0 0.0
    %755 = vmatpush.msra.mxu0 0.0
    %756 = vmatpush.msra.mxu0 0.0
    %757 = vmatpush.msra.mxu0 0.0
    %758 = vmatpush.msra.mxu0 0.0
    %759 = vmatpush.msra.mxu0 0.0
    %760 = vmatpush.msra.mxu0 0.0
    %761 = vmatpush.msra.mxu0 0.0
    %762 = vmatpush.msra.mxu0 0.0
    %763 = vmatpush.msra.mxu0 %v78
    %764 = vmatmul.f32.gmra.mxu0 %v746
    %v765 = vpop.f32.mrf.mxu0
    %v766 = vadd.f32 %v743, %v765
    %767 = vdwg.mxu0
    %v768 = vadd.f32 %v766, %v101
    %v769 = vtanh.pop %v768
    %v771 = vsel %vm48, %v722, 0
    %773 = vmatpush.msra.mxu0 0.0
    %774 = vmatpush.msra.mxu0 0.0
    %775 = vmatpush.msra.mxu0 0.0
    %776 = vmatpush.msra.mxu0 0.0
    %777 = vmatpush.msra.mxu0 0.0
    %778 = vmatpush.msra.mxu0 0.0
    %779 = vmatpush.msra.mxu0 0.0
    %780 = vmatpush.msra.mxu0 0.0
    %781 = vmatpush.msra.mxu0 0.0
    %782 = vmatpush.msra.mxu0 0.0
    %783 = vmatpush.msra.mxu0 0.0
    %784 = vmatpush.msra.mxu0 0.0
    %785 = vmatpush.msra.mxu0 %v39
    %786 = vmatpush.msra.mxu0 %v38
    %787 = vmatpush.msra.mxu0 %v37
    %788 = vmatpush.msra.mxu0 %v36
    %789 = vmatmul.f32.gmra.mxu0 %v771
    %v790 = vpop.f32.mrf.mxu0
    %v791 = vadd.f32 0.0, %v790
    %792 = vdwg.mxu0
    %v794 = vsel %vm48, %v769, 0
    %796 = vmatpush.msra.mxu0 0.0
    %797 = vmatpush.msra.mxu0 0.0
    %798 = vmatpush.msra.mxu0 0.0
    %799 = vmatpush.msra.mxu0 0.0
    %800 = vmatpush.msra.mxu0 0.0
    %801 = vmatpush.msra.mxu0 0.0
    %802 = vmatpush.msra.mxu0 0.0
    %803 = vmatpush.msra.mxu0 0.0
    %804 = vmatpush.msra.mxu0 0.0
    %805 = vmatpush.msra.mxu0 0.0
    %806 = vmatpush.msra.mxu0 0.0
    %807 = vmatpush.msra.mxu0 0.0
    %808 = vmatpush.msra.mxu0 %v31
    %809 = vmatpush.msra.mxu0 %v30
    %810 = vmatpush.msra.mxu0 %v29
    %811 = vmatpush.msra.mxu0 %v28
    %812 = vmatmul.f32.gmra.mxu0 %v794
    %v813 = vpop.f32.mrf.mxu0
    %v814 = vadd.f32 %v791, %v813
    %815 = vdwg.mxu0
    %v816 = vadd.f32 %v814, %v149
    %v817 = vtanh.pop %v816
    %v819 = vperm.slane %v46, 0
    %v822 = vsel %vm48, %v817, 0
    %824 = vmatpush.msra.mxu0 0.0
    %825 = vmatpush.msra.mxu0 0.0
    %826 = vmatpush.msra.mxu0 0.0
    %827 = vmatpush.msra.mxu0 0.0
    %828 = vmatpush.msra.mxu0 0.0
    %829 = vmatpush.msra.mxu0 0.0
    %830 = vmatpush.msra.mxu0 0.0
    %831 = vmatpush.msra.mxu0 0.0
    %832 = vmatpush.msra.mxu0 0.0
    %833 = vmatpush.msra.mxu0 0.0
    %834 = vmatpush.msra.mxu0 0.0
    %835 = vmatpush.msra.mxu0 0.0
    %836 = vmatpush.msra.mxu0 %v45
    %837 = vmatpush.msra.mxu0 %v44
    %838 = vmatpush.msra.mxu0 %v43
    %839 = vmatpush.msra.mxu0 %v42
    %840 = vmatmul.f32.gmra.mxu0 %v822
    %v841 = vpop.f32.mrf.mxu0
    %v842 = vadd.f32 %v819, %v841
    %843 = vdwg.mxu0
    %vm844 = vcmask 80896
    %v845 = vsel %vm844, %v842, -inf
    %846 = vmax.xlane.f32.xlu0 %v845
    %v847 = vpop.xlane.xlu0 %846
    %v848 = vsub.f32 %v842, %v847
    %v849 = vmul.f32 %v848, 1.442695
    %v850 = vpow.pop %v849
    %v851 = vsel %vm844, %v850, 0.0
    %852 = vadd.xlane.f32.xlu0 %v851
    %v853 = vpop.xlane.xlu0 %852
    %v854 = vrcp.pop %v853
    %v855 = vmul.f32 %v853, %v854
    %v856 = vsub.f32 1.0, %v855
    %v857 = vmul.f32 %v854, %v856
    %v858 = vadd.f32 %v854, %v857
    %vm859 = vweird.f32 %v853
    %vm860 = vweird.f32 %v854
    %vm861 = vmor %vm859, %vm860
    %v862 = vsel %vm861, %v854, %v858
    %v863 = vand.u32 2147483647, %v853
    %vm864 = vcmp.eq.f32.partialorder %v863, 8.507059e+37
    %v865 = vand.u32 %v853, 2147483648
    %v866 = vor.u32 1.1754944e-38, %v865
    %v867 = vsel %vm864, %v866, %v862
    %v868 = vmul.f32 %v850, %v867
    %869 = vst.msk [vmem:[#allocation2] sm:$0xff] %vm844, %v868
    // Predicated region
    $region30: #{tpu_custom_call.1} parent=1 // pred_check
      _
    $region31: #{tpu_custom_call.1} parent=1 // pred_check_branch
      %871 = sbr.rel (0) target = $region33
    $region32: #{tpu_custom_call.1} parent=1 // pred_region
      %873 = vsyncadd [#allocation3], 0
      %s875 = sshll.u32 [#allocation2], 4
      %s876 = int_to_ptr.vmem [resolvable:$true] %s875
      %s877 = sshll.u32 %s7, 4
      %s878 = int_to_ptr.hbm [resolvable:$true] %s877
      %880 = dma.vmem_to_hbm [thread:$0]  %s876, 128, %s878, [#allocation3]
    $region33: #{tpu_custom_call.1} parent=1 // pred_fallthru
      _
    // Predicated region
    $region34: #{tpu_custom_call.1} parent=1 // pred_check
      _
    $region35: #{tpu_custom_call.1} parent=1 // pred_check_branch
      %882 = sbr.rel (0) target = $region37
    $region36: #{tpu_custom_call.1} parent=1 // pred_region
      %884 = dma.done [#allocation3], 128
    $region37: #{tpu_custom_call.1} parent=1 // pred_fallthru
      _
    %885 = vsyncpa [#allocation3], 1

</llo_original>
